<compile_context>
chip_gen: v7x
topology: tpu7x:2x2x1
jax: 0.10.0
libtpu: 0.0.40
codegen_flags: <defaults>
</compile_context>

<pallas_src>
import jax
import jax.numpy as jnp
from jax import lax
from jax.experimental import pallas as pl
from jax.experimental.pallas import tpu as pltpu

_EPS_POOL = 1e-5   # eps added to spatial variance (SRMLayer._style_pooling)
_EPS_BN = 1e-5     # nn.BatchNorm2d default eps


# --------------------------------------------------------------------------- #
# Kernels
# --------------------------------------------------------------------------- #
def _srm_kernel(x_ref, p_ref, out_ref):
    """Single-pass kernel.

    x_ref:  (N, tc, HW) block in the input's native dtype.
    p_ref:  (tc, 4) f32 packed parameters [cfc_mean, cfc_std, bn_gamma, bn_beta].
    out_ref:(N, tc, HW) block, same dtype as x.
    """
    p = p_ref[...].astype(jnp.float32)                        # (tc, 4)
    xv = x_ref[...]                                           # native dtype
    n, _, hw = xv.shape

    # --- style pooling: streaming f32 sum / sum-of-squares (no f32 x copy
    #     kept alive past these two reductions) ---
    xf = xv.astype(jnp.float32)
    s1 = jnp.sum(xf, axis=2, keepdims=True)                   # (N, tc, 1)
    s2 = jnp.sum(xf * xf, axis=2, keepdims=True)              # (N, tc, 1)
    mean = s1 * (1.0 / hw)
    # unbiased var = (sumsq - hw*mean^2)/(hw-1); clamp guards f32 cancellation.
    var = jnp.maximum(s2 - mean * s1, 0.0) * (1.0 / max(hw - 1, 1))
    std = jnp.sqrt(var + _EPS_POOL)

    # --- style integration: z = mean*cfc[:,0] + std*cfc[:,1] (stays (N,tc,1)) ---
    z = mean * p[:, 0:1][None] + std * p[:, 1:2][None]        # (N, tc, 1)

    # --- BatchNorm2d, training-mode batch stats over N (spatial size 1) ---
    bmean = jnp.sum(z, axis=0, keepdims=True) * (1.0 / n)     # (1, tc, 1)
    zc = z - bmean
    bvar = jnp.sum(zc * zc, axis=0, keepdims=True) * (1.0 / n)    # biased
    z_hat = zc * lax.rsqrt(bvar + _EPS_BN) * p[:, 2:3][None] + p[:, 3:4][None]

    # --- gate: cast down ONCE on the tiny (N,tc,1) tile, multiply natively ---
    g = jax.nn.sigmoid(z_hat).astype(out_ref.dtype)           # (N, tc, 1)
    out_ref[...] = (xv * g).astype(out_ref.dtype)


def _srm_stats_kernel(x_ref, s1_ref, s2_ref):
    """Two-pass fallback, pass 1: per-row spatial sums over a (rows, HW) view."""
    xf = x_ref[...].astype(jnp.float32)                       # (tr, HW)
    s1_ref[...] = jnp.sum(xf, axis=1, keepdims=True)          # (tr, 1)
    s2_ref[...] = jnp.sum(xf * xf, axis=1, keepdims=True)     # (tr, 1)


def _srm_apply_kernel(x_ref, g_ref, out_ref):
    """Two-pass fallback, pass 2: elementwise gate apply (native dtype)."""
    g = g_ref[...].astype(out_ref.dtype)                      # (tr, 1)
    out_ref[...] = (x_ref[...] * g).astype(out_ref.dtype)


# --------------------------------------------------------------------------- #
# Tiling heuristics
# --------------------------------------------------------------------------- #
def _vmem_capacity_bytes():
    try:
        return int(pltpu.get_tpu_info().vmem_capacity_bytes)
    except Exception:
        return 64 * 1024 * 1024     # conservative (v7x per-TC VMEM)


def _pick_tile(total, align, per_unit_bytes, budget, *, allow_overflow):
    """Largest aligned tile of `total` whose per-grid-step footprint fits
    `budget`.  Prefers grid >= 2 (pipelining) and an even step count (2-TC
    split on v7x) as long as that does not shrink the tile below half the
    largest fitting one.  Returns None if nothing fits (unless allow_overflow),
    so the caller can switch to a multi-pass plan."""
    if total % align != 0:
        if total * per_unit_bytes <= budget or allow_overflow:
            return total
        return None
    divs = [d for d in range(align, total, align) if total % d == 0]
    fit = [d for d in divs if d * per_unit_bytes <= budget]
    if fit:
        best = max(fit)
        even = [d for d in fit if (total // d) % 2 == 0]
        if even and max(even) * 2 >= best:
            return max(even)
        return best
    if total * per_unit_bytes <= budget:
        return total
    if allow_overflow:
        return divs[0] if divs else total
    return None


# --------------------------------------------------------------------------- #
# Wrapper
# --------------------------------------------------------------------------- #
def srm_layer(x, cfc, gamma, beta, *, channel_block=None, two_pass=None):
    """SRMLayer forward. x: (N, C, H, W); cfc: (C, 2); gamma/beta: (C,).

    Returns an array of the same shape and dtype as x.
    """
    N, C, H, W = x.shape
    HW = H * W
    itemsize = jnp.dtype(x.dtype).itemsize

    cfc_f = cfc.astype(jnp.float32).reshape(C, 2)
    gamma_f = gamma.astype(jnp.float32).reshape(C)
    beta_f = beta.astype(jnp.float32).reshape(C)

    vmem_cap = _vmem_capacity_bytes()
    vmem_limit = min(int(0.8 * vmem_cap), 128 * 1024 * 1024)
    step_budget = (vmem_limit * 3) // 4

    # dtype-aware sublane alignment: f32 -> 8, bf16 -> 16, int8/fp8 -> 32
    sub_align = max(8, 32 // itemsize)

    x3 = x.reshape(N, C, HW)                    # free reshape, keeps x.dtype

    # Per-channel footprint of one grid step: double-buffered in+out blocks in
    # x.dtype plus a margin of one f32 temp/elem for the streaming reduction.
    per_channel_bytes = N * HW * (4 * itemsize + 4)

    tc = None
    if not two_pass:
        if channel_block is not None:
            tc = int(channel_block)
        else:
            tc = _pick_tile(C, sub_align, per_channel_bytes, step_budget,
                            allow_overflow=False)
    use_two_pass = bool(two_pass) or tc is None

    # ------------------------------------------------------------------ #
    # Single-pass path: one fused kernel, channel-tiled grid.
    # ------------------------------------------------------------------ #
    if not use_two_pass:
        assert C % tc == 0 and (tc == C or tc % sub_align == 0)
        grid = (C // tc,)
        params = jnp.concatenate(
            [cfc_f, gamma_f.reshape(C, 1), beta_f.reshape(C, 1)], axis=1)  # (C,4)

        ce = pl.CostEstimate(
            flops=6 * N * C * HW,
            transcendentals=2 * N * C,
            bytes_accessed=2 * int(x.nbytes) + int(params.nbytes))

        out3 = pl.pallas_call(
            _srm_kernel,
            out_shape=jax.ShapeDtypeStruct((N, C, HW), x.dtype),
            grid_spec=pltpu.PrefetchScalarGridSpec(
                num_scalar_prefetch=0,
                grid=grid,
                in_specs=[
                    pl.BlockSpec((N, tc, HW), lambda c: (0, c, 0)),   # x
                    pl.BlockSpec((tc, 4), lambda c: (c, 0)),          # packed params
                ],
                out_specs=pl.BlockSpec((N, tc, HW), lambda c: (0, c, 0)),
            ),
            compiler_params=pltpu.CompilerParams(
                dimension_semantics=("parallel",),
                vmem_limit_bytes=vmem_limit,
            ),
            cost_estimate=ce,
        )(x3, params)
        return out3.reshape(N, C, H, W)

    # ------------------------------------------------------------------ #
    # Two-pass fallback: huge N*HW (or forced).  Pass 1: row-tiled spatial
    # sums; tiny z/BN/sigmoid in plain JAX; pass 2: elementwise gate apply.
    # Costs one extra HBM read of x but keeps both passes at HBM roofline.
    # ------------------------------------------------------------------ #
    R = N * C
    x2 = x3.reshape(R, HW)
    per_row_bytes = HW * (4 * itemsize + 4)
    tr = _pick_tile(R, sub_align, per_row_bytes, step_budget, allow_overflow=True)
    assert R % tr == 0

    compiler_params = pltpu.CompilerParams(
        dimension_semantics=("parallel",),
        vmem_limit_bytes=vmem_limit,
    )

    ce_stats = pl.CostEstimate(
        flops=3 * R * HW, transcendentals=0,
        bytes_accessed=int(x.nbytes) + 8 * R)
    s1, s2 = pl.pallas_call(
        _srm_stats_kernel,
        out_shape=(jax.ShapeDtypeStruct((R, 1), jnp.float32),
                   jax.ShapeDtypeStruct((R, 1), jnp.float32)),
        grid_spec=pltpu.PrefetchScalarGridSpec(
            num_scalar_prefetch=0,
            grid=(R // tr,),
            in_specs=[pl.BlockSpec((tr, HW), lambda r: (r, 0))],
            out_specs=[pl.BlockSpec((tr, 1), lambda r: (r, 0)),
                       pl.BlockSpec((tr, 1), lambda r: (r, 0))],
        ),
        compiler_params=compiler_params,
        cost_estimate=ce_stats,
    )(x2)

    # Tiny (N, C) math: style integration + training-mode BN + sigmoid.
    s1 = s1.reshape(N, C)
    s2 = s2.reshape(N, C)
    mean = s1 * (1.0 / HW)
    var = jnp.maximum(s2 - mean * s1, 0.0) * (1.0 / max(HW - 1, 1))
    std = jnp.sqrt(var + _EPS_POOL)
    z = mean * cfc_f[:, 0] + std * cfc_f[:, 1]                # (N, C)
    bm = jnp.mean(z, axis=0)
    bv = jnp.mean((z - bm) ** 2, axis=0)                      # biased batch var
    z_hat = (z - bm) * lax.rsqrt(bv + _EPS_BN) * gamma_f + beta_f
    g = jax.nn.sigmoid(z_hat).reshape(R, 1)                   # f32, cast in-kernel

    ce_apply = pl.CostEstimate(
        flops=R * HW, transcendentals=0,
        bytes_accessed=2 * int(x.nbytes) + 4 * R)
    out2 = pl.pallas_call(
        _srm_apply_kernel,
        out_shape=jax.ShapeDtypeStruct((R, HW), x.dtype),
        grid_spec=pltpu.PrefetchScalarGridSpec(
            num_scalar_prefetch=0,
            grid=(R // tr,),
            in_specs=[pl.BlockSpec((tr, HW), lambda r: (r, 0)),
                      pl.BlockSpec((tr, 1), lambda r: (r, 0))],
            out_specs=pl.BlockSpec((tr, HW), lambda r: (r, 0)),
        ),
        compiler_params=compiler_params,
        cost_estimate=ce_apply,
    )(x2, g)
    return out2.reshape(N, C, H, W)


# --------------------------------------------------------------------------- #
# Pure-JAX reference (mirrors the PyTorch forward, training-mode BN)
# --------------------------------------------------------------------------- #
def srm_ref(x, cfc, gamma, beta):
    N, C, H, W = x.shape
    xf = x.astype(jnp.float32).reshape(N, C, -1)
    mean = xf.mean(axis=2)
    std = jnp.sqrt(xf.var(axis=2, ddof=1) + _EPS_POOL)
    z = mean * cfc[:, 0] + std * cfc[:, 1]                    # (N, C)
    bm = z.mean(axis=0)
    bv = z.var(axis=0)                                        # biased batch var
    z_hat = (z - bm) / jnp.sqrt(bv + _EPS_BN) * gamma + beta
    g = jax.nn.sigmoid(z_hat)
    return xf.reshape(N, C, H, W) * g[:, :, None, None]


if __name__ == "__main__":
    key = jax.random.PRNGKey(0)

    def make_inputs(k, N, C, H, W, dtype):
        k1, k2, k3, k4 = jax.random.split(k, 4)
        # Module __init__ fills cfc with 0 (output would be exactly
        # x*sigmoid(beta)); use small random params to exercise the full path.
        x = jax.random.normal(k1, (N, C, H, W), jnp.float32).astype(dtype)
        cfc = 0.1 * jax.random.normal(k2, (C, 2), jnp.float32)
        gamma = 1.0 + 0.1 * jax.random.normal(k3, (C,), jnp.float32)
        beta = 0.1 * jax.random.normal(k4, (C,), jnp.float32)
        return x, cfc, gamma, beta

    cases = [
        ((2, 4, 16, 16), jnp.float32, 5e-4, {}),     # spec shape: tc == C
        ((2, 32, 16, 16), jnp.bfloat16, 5e-2, {}),   # bf16, dtype-aware tc=16, grid=2
        ((2, 128, 7, 7), jnp.float32, 5e-4, {}),     # ragged HW, stays NCHW, tc=64
        ((2, 8, 16, 16), jnp.float32, 5e-4, {"two_pass": True}),  # fallback path
    ]
    keys = jax.random.split(key, len(cases))
    for k, ((N, C, H, W), dtype, atol, kw) in zip(keys, cases):
        x, cfc, gamma, beta = make_inputs(k, N, C, H, W, dtype)
        out = jax.block_until_ready(srm_layer(x, cfc, gamma, beta, **kw))
        assert out.shape == x.shape and out.dtype == x.dtype, (out.shape, out.dtype)
        ref = srm_ref(x, cfc, gamma, beta)
        err = float(jnp.max(jnp.abs(out.astype(jnp.float32) - ref)))
        assert err <= atol, ((N, C, H, W), str(dtype), err)

    print("KERNEL_OK")
</pallas_src>

<mosaic_0001>
module attributes {stable_mosaic.version = 11 : i64} {
  func.func @_srm_kernel(%arg0: i32, %arg1: memref<2x4x256xf32, #tpu.memory_space<vmem>>, %arg2: memref<4x4xf32, #tpu.memory_space<vmem>>, %arg3: memref<2x4x256xf32, #tpu.memory_space<vmem>>) attributes {dimension_semantics = [#tpu.dimension_semantics<parallel>], iteration_bounds = array<i64: 1>, scalar_prefetch = 0 : i64, scratch_operands = 0 : i64, tpu.core_type = #tpu.core_type<tc>, window_params = [{transform_indices = @transform_0, window_bounds = array<i64: 2, 4, 256>}, {transform_indices = @transform_1, window_bounds = array<i64: 4, 4>}, {transform_indices = @transform_2, window_bounds = array<i64: 2, 4, 256>}]} {
    %c0 = arith.constant 0 : index
    %c0_0 = arith.constant 0 : index
    %0 = vector.load %arg2[%c0, %c0_0] : memref<4x4xf32, #tpu.memory_space<vmem>>, vector<4x4xf32>
    %c0_1 = arith.constant 0 : index
    %c0_2 = arith.constant 0 : index
    %c0_3 = arith.constant 0 : index
    %1 = vector.load %arg1[%c0_1, %c0_2, %c0_3] : memref<2x4x256xf32, #tpu.memory_space<vmem>>, vector<2x4x256xf32>
    %cst = arith.constant dense<0.000000e+00> : vector<2x4xf32>
    %2 = vector.multi_reduction <add>, %1, %cst [2] : vector<2x4x256xf32> to vector<2x4xf32>
    %3 = vector.shape_cast %2 : vector<2x4xf32> to vector<2x4x1xf32>
    %4 = arith.mulf %1, %1 : vector<2x4x256xf32>
    %cst_4 = arith.constant dense<0.000000e+00> : vector<2x4xf32>
    %5 = vector.multi_reduction <add>, %4, %cst_4 [2] : vector<2x4x256xf32> to vector<2x4xf32>
    %6 = vector.shape_cast %5 : vector<2x4xf32> to vector<2x4x1xf32>
    %cst_5 = arith.constant 3.906250e-03 : f32
    %7 = vector.broadcast %cst_5 : f32 to vector<2x4x1xf32>
    %8 = arith.mulf %3, %7 : vector<2x4x1xf32>
    %9 = arith.mulf %8, %3 : vector<2x4x1xf32>
    %10 = arith.subf %6, %9 : vector<2x4x1xf32>
    %cst_6 = arith.constant 0.000000e+00 : f32
    %11 = vector.broadcast %cst_6 : f32 to vector<2x4x1xf32>
    %12 = arith.maximumf %10, %11 : vector<2x4x1xf32>
    %cst_7 = arith.constant 0.00392156886 : f32
    %13 = vector.broadcast %cst_7 : f32 to vector<2x4x1xf32>
    %14 = arith.mulf %12, %13 : vector<2x4x1xf32>
    %cst_8 = arith.constant 9.99999974E-6 : f32
    %15 = vector.broadcast %cst_8 : f32 to vector<2x4x1xf32>
    %16 = arith.addf %14, %15 : vector<2x4x1xf32>
    %17 = math.sqrt %16 : vector<2x4x1xf32>
    %18 = vector.extract_strided_slice %0 {offsets = [0, 0], sizes = [4, 1], strides = [1, 1]} : vector<4x4xf32> to vector<4x1xf32>
    %19 = vector.shape_cast %18 : vector<4x1xf32> to vector<1x4x1xf32>
    %20 = vector.broadcast %19 : vector<1x4x1xf32> to vector<2x4x1xf32>
    %21 = arith.mulf %8, %20 : vector<2x4x1xf32>
    %22 = vector.extract_strided_slice %0 {offsets = [0, 1], sizes = [4, 1], strides = [1, 1]} : vector<4x4xf32> to vector<4x1xf32>
    %23 = vector.shape_cast %22 : vector<4x1xf32> to vector<1x4x1xf32>
    %24 = vector.broadcast %23 : vector<1x4x1xf32> to vector<2x4x1xf32>
    %25 = arith.mulf %17, %24 : vector<2x4x1xf32>
    %26 = arith.addf %21, %25 : vector<2x4x1xf32>
    %cst_9 = arith.constant dense<0.000000e+00> : vector<4x1xf32>
    %27 = vector.multi_reduction <add>, %26, %cst_9 [0] : vector<2x4x1xf32> to vector<4x1xf32>
    %28 = vector.shape_cast %27 : vector<4x1xf32> to vector<1x4x1xf32>
    %cst_10 = arith.constant 5.000000e-01 : f32
    %29 = vector.broadcast %cst_10 : f32 to vector<1x4x1xf32>
    %30 = arith.mulf %28, %29 : vector<1x4x1xf32>
    %31 = vector.broadcast %30 : vector<1x4x1xf32> to vector<2x4x1xf32>
    %32 = arith.subf %26, %31 : vector<2x4x1xf32>
    %33 = arith.mulf %32, %32 : vector<2x4x1xf32>
    %cst_11 = arith.constant dense<0.000000e+00> : vector<4x1xf32>
    %34 = vector.multi_reduction <add>, %33, %cst_11 [0] : vector<2x4x1xf32> to vector<4x1xf32>
    %35 = vector.shape_cast %34 : vector<4x1xf32> to vector<1x4x1xf32>
    %cst_12 = arith.constant 5.000000e-01 : f32
    %36 = vector.broadcast %cst_12 : f32 to vector<1x4x1xf32>
    %37 = arith.mulf %35, %36 : vector<1x4x1xf32>
    %cst_13 = arith.constant 9.99999974E-6 : f32
    %38 = vector.broadcast %cst_13 : f32 to vector<1x4x1xf32>
    %39 = arith.addf %37, %38 : vector<1x4x1xf32>
    %40 = math.rsqrt %39 : vector<1x4x1xf32>
    %41 = vector.broadcast %40 : vector<1x4x1xf32> to vector<2x4x1xf32>
    %42 = arith.mulf %32, %41 : vector<2x4x1xf32>
    %43 = vector.extract_strided_slice %0 {offsets = [0, 2], sizes = [4, 1], strides = [1, 1]} : vector<4x4xf32> to vector<4x1xf32>
    %44 = vector.shape_cast %43 : vector<4x1xf32> to vector<1x4x1xf32>
    %45 = vector.broadcast %44 : vector<1x4x1xf32> to vector<2x4x1xf32>
    %46 = arith.mulf %42, %45 : vector<2x4x1xf32>
    %47 = vector.extract_strided_slice %0 {offsets = [0, 3], sizes = [4, 1], strides = [1, 1]} : vector<4x4xf32> to vector<4x1xf32>
    %48 = vector.shape_cast %47 : vector<4x1xf32> to vector<1x4x1xf32>
    %49 = vector.broadcast %48 : vector<1x4x1xf32> to vector<2x4x1xf32>
    %50 = arith.addf %46, %49 : vector<2x4x1xf32>
    %51 = arith.negf %50 : vector<2x4x1xf32>
    %52 = math.exp %51 : vector<2x4x1xf32>
    %cst_14 = arith.constant 1.000000e+00 : f32
    %53 = vector.broadcast %cst_14 : f32 to vector<2x4x1xf32>
    %54 = arith.addf %53, %52 : vector<2x4x1xf32>
    %55 = arith.divf %53, %54 : vector<2x4x1xf32>
    %56 = vector.broadcast %55 : vector<2x4x1xf32> to vector<2x4x256xf32>
    %57 = arith.mulf %1, %56 : vector<2x4x256xf32>
    %c0_15 = arith.constant 0 : index
    %c0_16 = arith.constant 0 : index
    %c0_17 = arith.constant 0 : index
    %58 = vector.load %arg3[%c0_15, %c0_16, %c0_17] : memref<2x4x256xf32, #tpu.memory_space<vmem>>, vector<2x4x256xf32>
    tpu.vector_store %arg3[%c0_15, %c0_16, %c0_17], %57 {strides = array<i32>} : memref<2x4x256xf32, #tpu.memory_space<vmem>>, vector<2x4x256xf32>,
    return
  }
  func.func @transform_0(%arg0: i32) -> (i32, i32, i32) {
    %c0_i32 = arith.constant 0 : i32
    %c0_i32_0 = arith.constant 0 : i32
    %c0_i32_1 = arith.constant 0 : i32
    return %c0_i32, %arg0, %c0_i32_0 : i32, i32, i32
  }
  func.func @transform_1(%arg0: i32) -> (i32, i32) {
    %c0_i32 = arith.constant 0 : i32
    %c0_i32_0 = arith.constant 0 : i32
    return %arg0, %c0_i32 : i32, i32
  }
  func.func @transform_2(%arg0: i32) -> (i32, i32, i32) {
    %c0_i32 = arith.constant 0 : i32
    %c0_i32_0 = arith.constant 0 : i32
    %c0_i32_1 = arith.constant 0 : i32
    return %c0_i32, %arg0, %c0_i32_0 : i32, i32, i32
  }
}

</mosaic_0001>

<llo_original>
// kernel: tpu_custom_call.1
$region0: #{tpu_custom_call.1}
  #allocation0 [shape = 'u32[]', space=smem, size = 0x4, offset = 0x4, fixed_abs, tag = 'smem constant byte address 0x4 - core index']
  #allocation1 [shape = 'u32[144,128]{1,0:T(1,128)}', space=vmem, size = 0x12000, scoped, tag = 'internal scratch']
  %s0 = inlined_call_operand.hbm [shape: f32[2,4,256], index: 0, kind: input, shape index: {}]
  %s1 = inlined_call_operand.hbm [shape: f32[4,4], index: 1, kind: input, shape index: {}]
  %s2 = inlined_call_operand.hbm [shape: f32[2,4,256], index: 2, kind: output, shape index: {}]
  %s3 = sld [smem:[#allocation0]]
  $region26: #{tpu_custom_call.1} parent=0
    _
  %s5 = ssub.s32 1, %s3
  %s6 = scalar_select 0, %s5, %s3
  $region1: #{tpu_custom_call.1} parent=0
    #allocation2 [shape = 'u8[8192]{0}', space=vmem, size = 0x2000, scoped, tag = 'input window, operand 0, single buffered']
    #allocation3 [shape = 's32[1]{0}', space=sflag, size = 0x4, scoped, tag = 'scoped memory for tpu_custom_call.1']
    #allocation4 [shape = 's32[1]{0}', space=sflag, size = 0x4, scoped, tag = 'scoped memory for tpu_custom_call.1']
    #allocation5 [shape = 'u8[2048]{0}', space=vmem, size = 0x800, scoped, tag = 'input window, operand 1, single buffered']
    #allocation6 [shape = 's32[1]{0}', space=sflag, size = 0x4, scoped, tag = 'scoped memory for tpu_custom_call.1']
    #allocation7 [shape = 'u8[8192]{0}', space=vmem, size = 0x2000, scoped, tag = 'output window, operand 0, single buffered']
    %7 = vsyncpa [#allocation3], 0
    %8 = vsyncpa [#allocation6], 0
    %9 = vsyncpa [#allocation4], 0
    // Predicated region
    $region2: #{tpu_custom_call.1} parent=1 // pred_check
      _
    $region3: #{tpu_custom_call.1} parent=1 // pred_check_branch
      %11 = sbr.rel (0) target = $region5
    $region4: #{tpu_custom_call.1} parent=1 // pred_region
      %s13 = ssub.s32 256, 256
      %14 = vsyncadd [#allocation3], %s13
      %s15 = sshll.u32 [#allocation2], 4
      %s16 = int_to_ptr.vmem [resolvable:$true] %s15
      %21 = dma.hbm_to_vmem [thread:$0]  %s0, 256, %s16, [#allocation3], 128, 128, 8
    $region5: #{tpu_custom_call.1} parent=1 // pred_fallthru
      _
    // Predicated region
    $region6: #{tpu_custom_call.1} parent=1 // pred_check
      _
    $region7: #{tpu_custom_call.1} parent=1 // pred_check_branch
      %23 = sbr.rel (0) target = $region9
    $region8: #{tpu_custom_call.1} parent=1 // pred_region
      %s25 = ssub.s32 64, 64
      %26 = vsyncadd [#allocation6], %s25
      %s28 = sshll.u32 [#allocation5], 4
      %s29 = int_to_ptr.vmem [resolvable:$true] %s28
      %31 = dma.hbm_to_vmem [thread:$0]  %s1, 64, %s29, [#allocation6]
    $region9: #{tpu_custom_call.1} parent=1 // pred_fallthru
      _
    // Predicated region
    $region10: #{tpu_custom_call.1} parent=1 // pred_check
      _
    $region11: #{tpu_custom_call.1} parent=1 // pred_check_branch
      %33 = sbr.rel (0) target = $region13
    $region12: #{tpu_custom_call.1} parent=1 // pred_region
      %34 = dma.done [#allocation3], 256
    $region13: #{tpu_custom_call.1} parent=1 // pred_fallthru
      _
    // Predicated region
    $region14: #{tpu_custom_call.1} parent=1 // pred_check
      _
    $region15: #{tpu_custom_call.1} parent=1 // pred_check_branch
      %36 = sbr.rel (0) target = $region17
    $region16: #{tpu_custom_call.1} parent=1 // pred_region
      %37 = dma.done [#allocation6], 64
    $region17: #{tpu_custom_call.1} parent=1 // pred_fallthru
      _
    %v38 = vld [vmem:[#allocation5] sm:$0xf]
    %v39 = vld [vmem:[#allocation2] sm:$0xff]
    %v40 = vld [vmem:[#allocation2 + $0x8] sm:$0xff]
    %v43 = vcombine.high %v39, %v39
    %v44 = vcombine.high %v40, %v40
    %vm47 = vcmask 1043456
    %v48 = vsel %vm47, %v39, 0.0
    %v49 = vsel %vm47, %v43, 0.0
    %v50 = vadd.f32 %v48, %v49
    %51 = vadd.xlane.f32.xlu0 %v50
    %v52 = vpop.xlane.xlu0 %51
    %v53 = vsel %vm47, %v40, 0.0
    %v54 = vsel %vm47, %v44, 0.0
    %v55 = vadd.f32 %v53, %v54
    %56 = vadd.xlane.f32.xlu0 %v55
    %v57 = vpop.xlane.xlu0 %56
    %v58 = vmul.f32 %v39, %v39
    %v59 = vmul.f32 %v40, %v40
    %v62 = vcombine.high %v58, %v58
    %v63 = vcombine.high %v59, %v59
    %v66 = vsel %vm47, %v58, 0.0
    %v67 = vsel %vm47, %v62, 0.0
    %v68 = vadd.f32 %v66, %v67
    %69 = vadd.xlane.f32.xlu0 %v68
    %v70 = vpop.xlane.xlu0 %69
    %v71 = vsel %vm47, %v59, 0.0
    %v72 = vsel %vm47, %v63, 0.0
    %v73 = vadd.f32 %v71, %v72
    %74 = vadd.xlane.f32.xlu0 %v73
    %v75 = vpop.xlane.xlu0 %74
    %v76 = vmul.f32 %v52, 0.00390625
    %v77 = vmul.f32 %v57, 0.00390625
    %v78 = vmul.f32 %v76, %v52
    %v79 = vmul.f32 %v77, %v57
    %v80 = vsub.f32 %v70, %v78
    %v81 = vsub.f32 %v75, %v79
    %v82 = vmax.f32 %v80, 0.0
    %v83 = vmax.f32 %v81, 0.0
    %v84 = vmul.f32 %v82, 0.003921569
    %v85 = vmul.f32 %v83, 0.003921569
    %v86 = vadd.f32 %v84, 1e-05
    %v87 = vadd.f32 %v85, 1e-05
    %v88 = vrsqrt.pop %v86
    %v89 = vmul.f32 %v86, %v88
    %vm90 = vcmp.eq.f32.partialorder %v86, inf
    %v91 = vsel %vm90, %v86, %v89
    %vm92 = vcmp.eq.f32.partialorder %v86, 0.0
    %v93 = vand.u32 %v86, 2147483648
    %v94 = vsel %vm92, %v93, %v91
    %v95 = vrsqrt.pop %v87
    %v96 = vmul.f32 %v87, %v95
    %vm97 = vcmp.eq.f32.partialorder %v87, inf
    %v98 = vsel %vm97, %v87, %v96
    %vm99 = vcmp.eq.f32.partialorder %v87, 0.0
    %v100 = vand.u32 %v87, 2147483648
    %v101 = vsel %vm99, %v100, %v98
    %v102 = vmul.f32 %v76, %v38
    %v103 = vmul.f32 %v77, %v38
    %v104 = vmul.f32 %v94, %v38
    %v105 = vmul.f32 %v101, %v38
    %108 = vrot.lane.b32.xlu0 %v104, 127
    %v109 = vpop.permute.xlu0 %108
    %110 = vrot.lane.b32.xlu0 %v105, 127
    %v111 = vpop.permute.xlu0 %110
    %v114 = vadd.f32 %v102, %v109
    %v115 = vadd.f32 %v103, %v111
    %vm116 = vcmask 3072
    %v117 = vsel %vm116, %v114, 0.0
    %v118 = vsel %vm116, %v115, 0.0
    %v119 = vadd.f32 %v117, %v118
    %v120 = vmul.f32 %v119, 0.5
    %v121 = vsub.f32 %v114, %v120
    %v122 = vsub.f32 %v115, %v120
    %v123 = vmul.f32 %v121, %v121
    %v124 = vmul.f32 %v122, %v122
    %v125 = vsel %vm116, %v123, 0.0
    %v126 = vsel %vm116, %v124, 0.0
    %v127 = vadd.f32 %v125, %v126
    %v128 = vmul.f32 %v127, 0.5
    %v129 = vadd.f32 %v128, 1e-05
    %v130 = vrsqrt.pop %v129
    %v131 = vmul.f32 %v121, %v130
    %v132 = vmul.f32 %v122, %v130
    %134 = vrot.lane.b32.xlu0 %v38, 126
    %v135 = vpop.permute.xlu0 %134
    %v137 = vmul.f32 %v131, %v135
    %v138 = vmul.f32 %v132, %v135
    %139 = vrot.lane.b32.xlu0 %v38, 125
    %v140 = vpop.permute.xlu0 %139
    %v142 = vadd.f32 %v137, %v140
    %v143 = vadd.f32 %v138, %v140
    %v144 = vxor.u32 %v142, 2147483648
    %v145 = vxor.u32 %v143, 2147483648
    %v146 = vmul.f32 %v144, 1.442695
    %v147 = vpow.pop %v146
    %v148 = vmul.f32 %v145, 1.442695
    %v149 = vpow.pop %v148
    %v150 = vadd.f32 %v147, 1.0
    %v151 = vadd.f32 %v149, 1.0
    %v152 = vrcp.pop %v150
    %v153 = vmul.f32 1.0, %v152
    %v154 = vrcp.pop %v151
    %v155 = vmul.f32 1.0, %v154
    %157 = vset.pattern.permute.xlu0 0
    %158 = vperm.xlu0 %157, %v153
    %v159 = vpop.permute.xlu0 %158
    %161 = vset.pattern.permute.xlu0 0
    %162 = vperm.xlu0 %161, %v155
    %v163 = vpop.permute.xlu0 %162
    %v165 = vunpack.c.l.s4 839922192
    %v166 = vunpack.c.0.s8 %v165
    %v167 = vlaneseq
    %v168 = vshrl.u32 %v167, 7
    %v169 = vsub.s32 %v166, %v168
    %v170 = vrot.slane %v159, %v169
    %v172 = vunpack.c.l.s4 839922192
    %v173 = vunpack.c.0.s8 %v172
    %v174 = vlaneseq
    %v175 = vshrl.u32 %v174, 7
    %v176 = vsub.s32 %v173, %v175
    %v177 = vrot.slane %v163, %v176
    %v180 = vmul.f32 %v39, %v170
    %v181 = vmul.f32 %v40, %v177
    %182 = vst [vmem:[#allocation7] sm:$0xff] %v180
    %183 = vst [vmem:[#allocation7 + $0x8] sm:$0xff] %v181
    // Predicated region
    $region18: #{tpu_custom_call.1} parent=1 // pred_check
      _
    $region19: #{tpu_custom_call.1} parent=1 // pred_check_branch
      %185 = sbr.rel (0) target = $region21
    $region20: #{tpu_custom_call.1} parent=1 // pred_region
      %s187 = ssub.s32 256, 256
      %188 = vsyncadd [#allocation4], %s187
      %s189 = sshll.u32 [#allocation7], 4
      %s190 = int_to_ptr.vmem [resolvable:$true] %s189
      %195 = dma.vmem_to_hbm [thread:$0]  %s190, 256, %s2, [#allocation4], 128, 128, 8
    $region21: #{tpu_custom_call.1} parent=1 // pred_fallthru
      _
    // Predicated region
    $region22: #{tpu_custom_call.1} parent=1 // pred_check
      _
    $region23: #{tpu_custom_call.1} parent=1 // pred_check_branch
      %197 = sbr.rel (0) target = $region25
    $region24: #{tpu_custom_call.1} parent=1 // pred_region
      %198 = dma.done [#allocation4], 256
    $region25: #{tpu_custom_call.1} parent=1 // pred_fallthru
      _
    %199 = vsyncpa [#allocation3], 1
    %200 = vsyncpa [#allocation6], 1
    %201 = vsyncpa [#allocation4], 1

</llo_original>
